<compile_context>
chip_gen: v5e
topology: v5e:2x2
jax: 0.10.0
libtpu: 0.0.40
codegen_flags: <defaults>
</compile_context>

<pallas_src>
import jax
import jax.numpy as jnp
from jax.experimental import pallas as pl
from jax.experimental.pallas import tpu as pltpu


# ---------------------------------------------------------------------------
# helpers
# ---------------------------------------------------------------------------

_ROW_PACK = 16          # bf16 sublane pack: rows only need multiples of 16
_ROW_TILE_CAP = 512     # perf review: raise row-tile cap (was 256)
_HEADROOM = 4 << 20     # headroom for Mosaic internal scratch


def _round_up(x, m):
    return (x + m - 1) // m * m


def _pad2d(x, rows, cols):
    return jnp.pad(x, ((0, rows - x.shape[0]), (0, cols - x.shape[1])))


def _row_tiling(m, cap=_ROW_TILE_CAP, pack=_ROW_PACK):
    """(m_padded, tm): rows padded only to the sublane pack (not 128); at least two
    row tiles whenever possible so the 'parallel' axis feeds both v7x TensorCores."""
    m_pad = _round_up(m, pack)
    n_tiles = max(-(-m_pad // cap), 2 if m_pad >= 2 * pack else 1)
    tm = _round_up(-(-m_pad // n_tiles), pack)
    return tm * n_tiles, tm


def _vmem_budget_bytes():
    """Generation-aware VMEM budget: ~0.6x physical capacity.
    ~76 MiB on v5e/v6e (128 MiB), ~38 MiB on v7x (64 MiB). Conservative fallback."""
    cap = 64 << 20
    try:
        info = pltpu.get_tpu_info()
        cap = int(getattr(info, "vmem_capacity_bytes", cap)) or cap
    except Exception:
        pass
    return int(cap * 6 // 10)


# ---------------------------------------------------------------------------
# kernels
# ---------------------------------------------------------------------------

def _make_resident_kernel(apply_relu, has_bias):
    """O = [relu](A @ S [+ b]) with S resident in VMEM: single MXU pass per row tile,
    no accumulator scratch, no init/finalize branches."""
    def kernel(*refs):
        if has_bias:
            a_ref, s_ref, b_ref, o_ref = refs
        else:
            a_ref, s_ref, o_ref = refs
        acc = jnp.dot(a_ref[...], s_ref[...], preferred_element_type=jnp.float32)
        if has_bias:
            acc = acc + b_ref[...]
        if apply_relu:
            acc = jnp.maximum(acc, 0.0)
        o_ref[...] = acc.astype(o_ref.dtype)
    return kernel


def _make_ktiled_kernel(apply_relu, has_bias):
    """O = [relu](A @ S [+ b]) with the reduction axis tiled (grid axis 1, 'arbitrary')
    and an f32 VMEM accumulator. Used only when S does not fit in VMEM."""
    def kernel(*refs):
        if has_bias:
            a_ref, s_ref, b_ref, o_ref, acc_ref = refs
        else:
            a_ref, s_ref, o_ref, acc_ref = refs

        @pl.when(pl.program_id(1) == 0)
        def _():
            acc_ref[...] = jnp.zeros_like(acc_ref)

        acc_ref[...] += jnp.dot(a_ref[...], s_ref[...],
                                preferred_element_type=jnp.float32)

        @pl.when(pl.program_id(1) == pl.num_programs(1) - 1)
        def _():
            acc = acc_ref[...]
            if has_bias:
                acc = acc + b_ref[...]
            if apply_relu:
                acc = jnp.maximum(acc, 0.0)
            o_ref[...] = acc.astype(o_ref.dtype)
    return kernel


# ---------------------------------------------------------------------------
# pallas_call wrapper
# ---------------------------------------------------------------------------

def _gcn_matmul(a, s, bias=None, *, apply_relu=False, out_dtype, tm,
                tk_cap=512):
    """O = [relu](A @ S [+ bias]).

    A:(M,K), S:(K,N), bias:(1,N) or None. M % tm == 0, tm % 16 == 0, N % 128 == 0.
    Chooses a resident-S single-pass kernel when S fits the VMEM budget, otherwise
    falls back to a K-tiled accumulator kernel.
    """
    M, K = a.shape
    K2, N = s.shape
    assert K == K2 and M % tm == 0 and tm % _ROW_PACK == 0

    budget = _vmem_budget_bytes()
    ab = jnp.dtype(a.dtype).itemsize
    sb = jnp.dtype(s.dtype).itemsize
    ob = jnp.dtype(out_dtype).itemsize
    has_bias = bias is not None
    bias_bytes = (2 * N * 4) if has_bias else 0

    # ---------------- resident-S path ----------------
    def resident_need(t):
        # double-buffered A tile + (conservatively) double-buffered resident S
        # + double-buffered output tile + bias + headroom
        return 2 * t * K * ab + 2 * K * N * sb + 2 * t * N * ob + bias_bytes + _HEADROOM

    tm_r = tm
    while resident_need(tm_r) > budget and tm_r % (2 * _ROW_PACK) == 0:
        tm_r //= 2

    if resident_need(tm_r) <= budget:
        grid = (M // tm_r,)
        in_specs = [pl.BlockSpec((tm_r, K), lambda i: (i, 0)),
                    pl.BlockSpec((K, N), lambda i: (0, 0))]   # constant -> fetched once
        args = [a, s]
        if has_bias:
            in_specs.append(pl.BlockSpec((1, N), lambda i: (0, 0)))
            args.append(bias)
        cost = pl.CostEstimate(
            flops=2 * M * K * N + (M * N if (has_bias or apply_relu) else 0),
            transcendentals=0,
            bytes_accessed=M * K * ab + K * N * sb + M * N * ob
                           + (N * 4 if has_bias else 0),
        )
        vmem = int(min(budget, max(resident_need(tm_r), 16 << 20)))
        return pl.pallas_call(
            _make_resident_kernel(apply_relu, has_bias),
            out_shape=jax.ShapeDtypeStruct((M, N), out_dtype),
            grid_spec=pltpu.PrefetchScalarGridSpec(
                num_scalar_prefetch=0,
                grid=grid,
                in_specs=in_specs,
                out_specs=pl.BlockSpec((tm_r, N), lambda i: (i, 0)),
                scratch_shapes=[],
            ),
            compiler_params=pltpu.CompilerParams(
                dimension_semantics=("parallel",),
                vmem_limit_bytes=vmem,
            ),
            cost_estimate=cost,
        )(*args)

    # ---------------- K-tiled fallback (S does not fit in VMEM) ----------------
    # The reduction dim must be a multiple of the 128-lane tile when it is tiled.
    Kp = _round_up(K, 128)
    if Kp != K:
        a = jnp.pad(a, ((0, 0), (0, Kp - K)))
        s = jnp.pad(s, ((0, Kp - K), (0, 0)))
        K = Kp
    tk = tk_cap
    while K % tk != 0:
        tk //= 2  # terminates at 128 since K % 128 == 0

    def tiled_need(t):
        return (2 * t * tk * ab + 2 * tk * N * sb + 2 * t * N * ob
                + t * N * 4 + bias_bytes + _HEADROOM)

    tm_t = tm
    while tiled_need(tm_t) > budget and tm_t % (2 * _ROW_PACK) == 0:
        tm_t //= 2

    grid = (M // tm_t, K // tk)
    in_specs = [pl.BlockSpec((tm_t, tk), lambda i, k: (i, k)),
                pl.BlockSpec((tk, N), lambda i, k: (k, 0))]
    args = [a, s]
    if has_bias:
        in_specs.append(pl.BlockSpec((1, N), lambda i, k: (0, 0)))
        args.append(bias)
    cost = pl.CostEstimate(
        flops=2 * M * K * N + (M * N if (has_bias or apply_relu) else 0),
        transcendentals=0,
        bytes_accessed=M * K * ab + (M // tm_t) * K * N * sb + M * N * ob
                       + (N * 4 if has_bias else 0),
    )
    vmem = int(min(budget, max(tiled_need(tm_t), 16 << 20)))
    return pl.pallas_call(
        _make_ktiled_kernel(apply_relu, has_bias),
        out_shape=jax.ShapeDtypeStruct((M, N), out_dtype),
        grid_spec=pltpu.PrefetchScalarGridSpec(
            num_scalar_prefetch=0,
            grid=grid,
            in_specs=in_specs,
            out_specs=pl.BlockSpec((tm_t, N), lambda i, k: (i, 0)),
            scratch_shapes=[pltpu.VMEM((tm_t, N), jnp.float32)],
        ),
        compiler_params=pltpu.CompilerParams(
            dimension_semantics=("parallel", "arbitrary"),
            vmem_limit_bytes=vmem,
        ),
        cost_estimate=cost,
    )(*args)


# ---------------------------------------------------------------------------
# forward
# ---------------------------------------------------------------------------

def gnn_forward(ufea, vfea, uv_adj, vu_adj, adj, w_user, b_user, w_item, b_item,
                *, compute_dtype=jnp.bfloat16):
    """Bipartite-GCN hot path: two hoisted projections + two aggregations with fused
    bias + relu. `adj` is accepted for interface parity but unused by the 1-layer GCN.
    """
    del adj  # unused by the one-layer bipartite GCN
    n_user, f_u = ufea.shape
    n_item, f_v = vfea.shape
    hidden = w_user.shape[1]

    # Lane dims (hidden / feature) padded to 128 (lane-dense, unmasked stores);
    # row dims padded only to the bf16 sublane pack / chosen row tile.
    hp = _round_up(hidden, 128)
    fup = _round_up(f_u, 128)
    fvp = _round_up(f_v, 128)
    nup, tu = _row_tiling(n_user)
    nip, tv = _row_tiling(n_item)

    cd = compute_dtype
    ufea_p = _pad2d(ufea, nup, fup).astype(cd)
    vfea_p = _pad2d(vfea, nip, fvp).astype(cd)
    uv_p = _pad2d(uv_adj, nup, nip).astype(cd)        # bf16 adjacency: halves HBM traffic
    vu_p = _pad2d(vu_adj, nip, nup).astype(cd)
    wu_p = _pad2d(w_user, fup, hp).astype(cd)
    wi_p = _pad2d(w_item, fvp, hp).astype(cd)
    bu_p = _pad2d(b_user.reshape(1, -1), 1, hp).astype(jnp.float32)
    bi_p = _pad2d(b_item.reshape(1, -1), 1, hp).astype(jnp.float32)

    # Hoisted projections (computed exactly once; resident-W single-pass kernels).
    support_item = _gcn_matmul(vfea_p, wi_p, out_dtype=cd, tm=tv)   # (nip, hp)
    support_user = _gcn_matmul(ufea_p, wu_p, out_dtype=cd, tm=tu)   # (nup, hp)

    # Aggregations with fused bias + relu; bf16 output halves the writeback bytes.
    learn_user_p = _gcn_matmul(uv_p, support_item, bi_p, apply_relu=True,
                               out_dtype=cd, tm=tu)                  # (nup, hp)
    learn_item_p = _gcn_matmul(vu_p, support_user, bu_p, apply_relu=True,
                               out_dtype=cd, tm=tv)                  # (nip, hp)

    # Slice to the logical shape + f32 for interface parity with the PyTorch module.
    # (Padded-aware consumers could consume learn_*_p directly and skip this copy.)
    learn_user = learn_user_p[:n_user, :hidden].astype(jnp.float32)
    learn_item = learn_item_p[:n_item, :hidden].astype(jnp.float32)
    return learn_user, learn_item


def embedding_layer_forward(params, ufea, vfea, uv_adj, vu_adj, adj):
    """Mirrors EmbeddingLayer.forward: (learn_user, learn_item) = GNN(...)."""
    return gnn_forward(ufea, vfea, uv_adj, vu_adj, adj,
                       params["gnn_w_user"], params["gnn_b_user"],
                       params["gnn_w_item"], params["gnn_b_item"])


# ---------------------------------------------------------------------------
# params / reference / self-test
# ---------------------------------------------------------------------------

def init_params(key, number_user, number_item, feature_dim, hidden_dim):
    ks = jax.random.split(key, 8)
    scale = 0.1
    return {
        # nn.Embedding tables (glue to build ufea/vfea, like the parent model does)
        "user_embedding": scale * jax.random.normal(ks[0], (number_user, feature_dim), jnp.float32),
        "item_embedding": scale * jax.random.normal(ks[1], (number_item, feature_dim), jnp.float32),
        # nn.Linear(feature_dim, hidden_dim) for user_embed / item_embed
        "user_embed_w": scale * jax.random.normal(ks[2], (feature_dim, hidden_dim), jnp.float32),
        "user_embed_b": jnp.zeros((hidden_dim,), jnp.float32),
        "item_embed_w": scale * jax.random.normal(ks[3], (feature_dim, hidden_dim), jnp.float32),
        "item_embed_b": jnp.zeros((hidden_dim,), jnp.float32),
        # GNN (one bipartite GCN layer) weights
        "gnn_w_user": scale * jax.random.normal(ks[4], (hidden_dim, hidden_dim), jnp.float32),
        "gnn_b_user": jnp.zeros((1, hidden_dim), jnp.float32),
        "gnn_w_item": scale * jax.random.normal(ks[5], (hidden_dim, hidden_dim), jnp.float32),
        "gnn_b_item": jnp.zeros((1, hidden_dim), jnp.float32),
    }


def reference_forward(params, ufea, vfea, uv_adj, vu_adj, adj):
    del adj
    lu = jnp.maximum(uv_adj @ (vfea @ params["gnn_w_item"]) + params["gnn_b_item"], 0.0)
    li = jnp.maximum(vu_adj @ (ufea @ params["gnn_w_user"]) + params["gnn_b_user"], 0.0)
    return lu, li


if __name__ == "__main__":
    number_user, number_item = 16, 24
    feature_dim, hidden_dim = 32, 32

    key = jax.random.PRNGKey(0)
    pkey, akey = jax.random.split(key)
    params = init_params(pkey, number_user, number_item, feature_dim, hidden_dim)

    # ufea / vfea: embeddings indexed by arange (as the parent BiGI model does),
    # projected through the Linear embed layers -- plain-JAX glue.
    user_index = jnp.arange(number_user)
    item_index = jnp.arange(number_item)
    ufea = params["user_embedding"][user_index] @ params["user_embed_w"] + params["user_embed_b"]
    vfea = params["item_embedding"][item_index] @ params["item_embed_w"] + params["item_embed_b"]

    # Dense, row-normalized bipartite adjacencies.
    raw = (jax.random.uniform(akey, (number_user, number_item)) > 0.6).astype(jnp.float32)
    uv_adj = raw / jnp.maximum(raw.sum(axis=1, keepdims=True), 1.0)
    vu_adj = raw.T / jnp.maximum(raw.T.sum(axis=1, keepdims=True), 1.0)
    n_total = number_user + number_item
    adj = jnp.zeros((n_total, n_total), jnp.float32)  # unused by the GCN layer

    fwd = jax.jit(embedding_layer_forward)
    learn_user, learn_item = fwd(params, ufea, vfea, uv_adj, vu_adj, adj)
    jax.block_until_ready((learn_user, learn_item))

    ref_user, ref_item = reference_forward(params, ufea, vfea, uv_adj, vu_adj, adj)
    assert learn_user.shape == (number_user, hidden_dim)
    assert learn_item.shape == (number_item, hidden_dim)
    # bf16 inputs/outputs on the MXU with f32 accumulation -> loosened tolerances vs f32 ref.
    assert jnp.allclose(learn_user, ref_user, rtol=2e-2, atol=2e-3)
    assert jnp.allclose(learn_item, ref_item, rtol=2e-2, atol=2e-3)

    print("KERNEL_OK")
</pallas_src>

<mosaic_0001>
module attributes {stable_mosaic.version = 11 : i64} {
  func.func @kernel(%arg0: i32, %arg1: memref<16x128xbf16, #tpu.memory_space<vmem>>, %arg2: memref<128x128xbf16, #tpu.memory_space<vmem>>, %arg3: memref<16x128xbf16, #tpu.memory_space<vmem>>) attributes {dimension_semantics = [#tpu.dimension_semantics<parallel>], iteration_bounds = array<i64: 1>, scalar_prefetch = 0 : i64, scratch_operands = 0 : i64, tpu.core_type = #tpu.core_type<tc>, window_params = [{transform_indices = @transform_0, window_bounds = array<i64: 16, 128>}, {pipeline_mode = #tpu.pipeline_mode<synchronous>, transform_indices = @transform_1, window_bounds = array<i64: 128, 128>}, {transform_indices = @transform_2, window_bounds = array<i64: 16, 128>}]} {
    %c0 = arith.constant 0 : index
    %c0_0 = arith.constant 0 : index
    %0 = vector.load %arg1[%c0, %c0_0] : memref<16x128xbf16, #tpu.memory_space<vmem>>, vector<16x128xbf16>
    %c0_1 = arith.constant 0 : index
    %c0_2 = arith.constant 0 : index
    %1 = vector.load %arg2[%c0_1, %c0_2] : memref<128x128xbf16, #tpu.memory_space<vmem>>, vector<128x128xbf16>
    %cst = arith.constant dense<0.000000e+00> : vector<16x128xf32>
    %2 = tpu.matmul %0, %1, %cst {dimension_numbers = #tpu.dot_dimension_numbers<[1], [0], [0], [1], [0, 0, 1, 1], [], []>} : vector<16x128xbf16>, vector<128x128xbf16>, vector<16x128xf32> -> vector<16x128xf32>
    %3 = arith.truncf %2 : vector<16x128xf32> to vector<16x128xbf16>
    %c0_3 = arith.constant 0 : index
    %c0_4 = arith.constant 0 : index
    %4 = vector.load %arg3[%c0_3, %c0_4] : memref<16x128xbf16, #tpu.memory_space<vmem>>, vector<16x128xbf16>
    tpu.vector_store %arg3[%c0_3, %c0_4], %3 {strides = array<i32>} : memref<16x128xbf16, #tpu.memory_space<vmem>>, vector<16x128xbf16>,
    return
  }
  func.func @transform_0(%arg0: i32) -> (i32, i32) {
    %c0_i32 = arith.constant 0 : i32
    %c0_i32_0 = arith.constant 0 : i32
    return %arg0, %c0_i32 : i32, i32
  }
  func.func @transform_1(%arg0: i32) -> (i32, i32) {
    %c0_i32 = arith.constant 0 : i32
    %c0_i32_0 = arith.constant 0 : i32
    %c0_i32_1 = arith.constant 0 : i32
    return %c0_i32, %c0_i32_0 : i32, i32
  }
  func.func @transform_2(%arg0: i32) -> (i32, i32) {
    %c0_i32 = arith.constant 0 : i32
    %c0_i32_0 = arith.constant 0 : i32
    return %arg0, %c0_i32 : i32, i32
  }
}

module attributes {stable_mosaic.version = 11 : i64} {
  func.func @kernel(%arg0: i32, %arg1: memref<16x16xbf16, #tpu.memory_space<vmem>>, %arg2: memref<16x128xbf16, #tpu.memory_space<vmem>>, %arg3: memref<1x128xf32, #tpu.memory_space<vmem>>, %arg4: memref<16x128xbf16, #tpu.memory_space<vmem>>) attributes {dimension_semantics = [#tpu.dimension_semantics<parallel>], iteration_bounds = array<i64: 2>, scalar_prefetch = 0 : i64, scratch_operands = 0 : i64, tpu.core_type = #tpu.core_type<tc>, window_params = [{transform_indices = @transform_0, window_bounds = array<i64: 16, 16>}, {pipeline_mode = #tpu.pipeline_mode<synchronous>, transform_indices = @transform_1, window_bounds = array<i64: 16, 128>}, {pipeline_mode = #tpu.pipeline_mode<synchronous>, transform_indices = @transform_2, window_bounds = array<i64: 1, 128>}, {transform_indices = @transform_3, window_bounds = array<i64: 16, 128>}]} {
    %c0 = arith.constant 0 : index
    %c0_0 = arith.constant 0 : index
    %0 = vector.load %arg1[%c0, %c0_0] : memref<16x16xbf16, #tpu.memory_space<vmem>>, vector<16x16xbf16>
    %c0_1 = arith.constant 0 : index
    %c0_2 = arith.constant 0 : index
    %1 = vector.load %arg2[%c0_1, %c0_2] : memref<16x128xbf16, #tpu.memory_space<vmem>>, vector<16x128xbf16>
    %cst = arith.constant dense<0.000000e+00> : vector<16x128xf32>
    %2 = tpu.matmul %0, %1, %cst {dimension_numbers = #tpu.dot_dimension_numbers<[1], [0], [0], [1], [0, 0, 1, 1], [], []>} : vector<16x16xbf16>, vector<16x128xbf16>, vector<16x128xf32> -> vector<16x128xf32>
    %c0_3 = arith.constant 0 : index
    %c0_4 = arith.constant 0 : index
    %3 = vector.load %arg3[%c0_3, %c0_4] : memref<1x128xf32, #tpu.memory_space<vmem>>, vector<1x128xf32>
    %4 = vector.broadcast %3 : vector<1x128xf32> to vector<16x128xf32>
    %5 = arith.addf %2, %4 : vector<16x128xf32>
    %cst_5 = arith.constant 0.000000e+00 : f32
    %6 = vector.broadcast %cst_5 : f32 to vector<16x128xf32>
    %7 = arith.maximumf %5, %6 : vector<16x128xf32>
    %8 = arith.truncf %7 : vector<16x128xf32> to vector<16x128xbf16>
    %c0_6 = arith.constant 0 : index
    %c0_7 = arith.constant 0 : index
    %9 = vector.load %arg4[%c0_6, %c0_7] : memref<16x128xbf16, #tpu.memory_space<vmem>>, vector<16x128xbf16>
    tpu.vector_store %arg4[%c0_6, %c0_7], %8 {strides = array<i32>} : memref<16x128xbf16, #tpu.memory_space<vmem>>, vector<16x128xbf16>,
    return
  }
  func.func @transform_0(%arg0: i32) -> (i32, i32) {
    %c0_i32 = arith.constant 0 : i32
    %c0_i32_0 = arith.constant 0 : i32
    return %arg0, %c0_i32 : i32, i32
  }
  func.func @transform_1(%arg0: i32) -> (i32, i32) {
    %c0_i32 = arith.constant 0 : i32
    %c0_i32_0 = arith.constant 0 : i32
    %c0_i32_1 = arith.constant 0 : i32
    return %c0_i32, %c0_i32_0 : i32, i32
  }
  func.func @transform_2(%arg0: i32) -> (i32, i32) {
    %c0_i32 = arith.constant 0 : i32
    %c0_i32_0 = arith.constant 0 : i32
    %c0_i32_1 = arith.constant 0 : i32
    return %c0_i32, %c0_i32_0 : i32, i32
  }
  func.func @transform_3(%arg0: i32) -> (i32, i32) {
    %c0_i32 = arith.constant 0 : i32
    %c0_i32_0 = arith.constant 0 : i32
    return %arg0, %c0_i32 : i32, i32
  }
}

module attributes {stable_mosaic.version = 11 : i64} {
  func.func @kernel(%arg0: i32, %arg1: memref<16x128xbf16, #tpu.memory_space<vmem>>, %arg2: memref<128x128xbf16, #tpu.memory_space<vmem>>, %arg3: memref<16x128xbf16, #tpu.memory_space<vmem>>) attributes {dimension_semantics = [#tpu.dimension_semantics<parallel>], iteration_bounds = array<i64: 2>, scalar_prefetch = 0 : i64, scratch_operands = 0 : i64, tpu.core_type = #tpu.core_type<tc>, window_params = [{transform_indices = @transform_0, window_bounds = array<i64: 16, 128>}, {pipeline_mode = #tpu.pipeline_mode<synchronous>, transform_indices = @transform_1, window_bounds = array<i64: 128, 128>}, {transform_indices = @transform_2, window_bounds = array<i64: 16, 128>}]} {
    %c0 = arith.constant 0 : index
    %c0_0 = arith.constant 0 : index
    %0 = vector.load %arg1[%c0, %c0_0] : memref<16x128xbf16, #tpu.memory_space<vmem>>, vector<16x128xbf16>
    %c0_1 = arith.constant 0 : index
    %c0_2 = arith.constant 0 : index
    %1 = vector.load %arg2[%c0_1, %c0_2] : memref<128x128xbf16, #tpu.memory_space<vmem>>, vector<128x128xbf16>
    %cst = arith.constant dense<0.000000e+00> : vector<16x128xf32>
    %2 = tpu.matmul %0, %1, %cst {dimension_numbers = #tpu.dot_dimension_numbers<[1], [0], [0], [1], [0, 0, 1, 1], [], []>} : vector<16x128xbf16>, vector<128x128xbf16>, vector<16x128xf32> -> vector<16x128xf32>
    %3 = arith.truncf %2 : vector<16x128xf32> to vector<16x128xbf16>
    %c0_3 = arith.constant 0 : index
    %c0_4 = arith.constant 0 : index
    %4 = vector.load %arg3[%c0_3, %c0_4] : memref<16x128xbf16, #tpu.memory_space<vmem>>, vector<16x128xbf16>
    tpu.vector_store %arg3[%c0_3, %c0_4], %3 {strides = array<i32>} : memref<16x128xbf16, #tpu.memory_space<vmem>>, vector<16x128xbf16>,
    return
  }
  func.func @transform_0(%arg0: i32) -> (i32, i32) {
    %c0_i32 = arith.constant 0 : i32
    %c0_i32_0 = arith.constant 0 : i32
    return %arg0, %c0_i32 : i32, i32
  }
  func.func @transform_1(%arg0: i32) -> (i32, i32) {
    %c0_i32 = arith.constant 0 : i32
    %c0_i32_0 = arith.constant 0 : i32
    %c0_i32_1 = arith.constant 0 : i32
    return %c0_i32, %c0_i32_0 : i32, i32
  }
  func.func @transform_2(%arg0: i32) -> (i32, i32) {
    %c0_i32 = arith.constant 0 : i32
    %c0_i32_0 = arith.constant 0 : i32
    return %arg0, %c0_i32 : i32, i32
  }
}

module attributes {stable_mosaic.version = 11 : i64} {
  func.func @kernel(%arg0: i32, %arg1: memref<16x32xbf16, #tpu.memory_space<vmem>>, %arg2: memref<32x128xbf16, #tpu.memory_space<vmem>>, %arg3: memref<1x128xf32, #tpu.memory_space<vmem>>, %arg4: memref<16x128xbf16, #tpu.memory_space<vmem>>) attributes {dimension_semantics = [#tpu.dimension_semantics<parallel>], iteration_bounds = array<i64: 1>, scalar_prefetch = 0 : i64, scratch_operands = 0 : i64, tpu.core_type = #tpu.core_type<tc>, window_params = [{transform_indices = @transform_0, window_bounds = array<i64: 16, 32>}, {pipeline_mode = #tpu.pipeline_mode<synchronous>, transform_indices = @transform_1, window_bounds = array<i64: 32, 128>}, {pipeline_mode = #tpu.pipeline_mode<synchronous>, transform_indices = @transform_2, window_bounds = array<i64: 1, 128>}, {transform_indices = @transform_3, window_bounds = array<i64: 16, 128>}]} {
    %c0 = arith.constant 0 : index
    %c0_0 = arith.constant 0 : index
    %0 = vector.load %arg1[%c0, %c0_0] : memref<16x32xbf16, #tpu.memory_space<vmem>>, vector<16x32xbf16>
    %c0_1 = arith.constant 0 : index
    %c0_2 = arith.constant 0 : index
    %1 = vector.load %arg2[%c0_1, %c0_2] : memref<32x128xbf16, #tpu.memory_space<vmem>>, vector<32x128xbf16>
    %cst = arith.constant dense<0.000000e+00> : vector<16x128xf32>
    %2 = tpu.matmul %0, %1, %cst {dimension_numbers = #tpu.dot_dimension_numbers<[1], [0], [0], [1], [0, 0, 1, 1], [], []>} : vector<16x32xbf16>, vector<32x128xbf16>, vector<16x128xf32> -> vector<16x128xf32>
    %c0_3 = arith.constant 0 : index
    %c0_4 = arith.constant 0 : index
    %3 = vector.load %arg3[%c0_3, %c0_4] : memref<1x128xf32, #tpu.memory_space<vmem>>, vector<1x128xf32>
    %4 = vector.broadcast %3 : vector<1x128xf32> to vector<16x128xf32>
    %5 = arith.addf %2, %4 : vector<16x128xf32>
    %cst_5 = arith.constant 0.000000e+00 : f32
    %6 = vector.broadcast %cst_5 : f32 to vector<16x128xf32>
    %7 = arith.maximumf %5, %6 : vector<16x128xf32>
    %8 = arith.truncf %7 : vector<16x128xf32> to vector<16x128xbf16>
    %c0_6 = arith.constant 0 : index
    %c0_7 = arith.constant 0 : index
    %9 = vector.load %arg4[%c0_6, %c0_7] : memref<16x128xbf16, #tpu.memory_space<vmem>>, vector<16x128xbf16>
    tpu.vector_store %arg4[%c0_6, %c0_7], %8 {strides = array<i32>} : memref<16x128xbf16, #tpu.memory_space<vmem>>, vector<16x128xbf16>,
    return
  }
  func.func @transform_0(%arg0: i32) -> (i32, i32) {
    %c0_i32 = arith.constant 0 : i32
    %c0_i32_0 = arith.constant 0 : i32
    return %arg0, %c0_i32 : i32, i32
  }
  func.func @transform_1(%arg0: i32) -> (i32, i32) {
    %c0_i32 = arith.constant 0 : i32
    %c0_i32_0 = arith.constant 0 : i32
    %c0_i32_1 = arith.constant 0 : i32
    return %c0_i32, %c0_i32_0 : i32, i32
  }
  func.func @transform_2(%arg0: i32) -> (i32, i32) {
    %c0_i32 = arith.constant 0 : i32
    %c0_i32_0 = arith.constant 0 : i32
    %c0_i32_1 = arith.constant 0 : i32
    return %c0_i32, %c0_i32_0 : i32, i32
  }
  func.func @transform_3(%arg0: i32) -> (i32, i32) {
    %c0_i32 = arith.constant 0 : i32
    %c0_i32_0 = arith.constant 0 : i32
    return %arg0, %c0_i32 : i32, i32
  }
}

</mosaic_0001>

<llo_original>
// kernel: embedding_layer_forward.5
$region0: #{embedding_layer_forward.5}
  #allocation0 [shape = 'u32[]', space=smem, size = 0x4, offset = 0x4, fixed_abs, tag = 'smem constant byte address 0x4 - core index']
  #allocation1 [shape = 'u32[72,128]{1,0:T(1,128)}', space=vmem, size = 0x9000, scoped, tag = 'internal scratch']
  %s0 = inlined_call_operand.vmem [shape: bf16[16,128], index: 0, kind: input, shape index: {}]
  %s1 = inlined_call_operand.vmem [shape: bf16[128,128], index: 1, kind: input, shape index: {}]
  %s2 = inlined_call_operand.vmem [shape: bf16[16,128], index: 2, kind: output, shape index: {}]
  %s3 = sld [smem:[#allocation0]]
  $region18: #{embedding_layer_forward.5} parent=0
    _
  %s5 = ssub.s32 1, %s3
  %s6 = scalar_select 0, %s5, %s3
  // Predicated region
  $region2: #{embedding_layer_forward.5} parent=0 // pred_check
    _
  $region3: #{embedding_layer_forward.5} parent=0 // pred_check_branch
    %8 = sbr.rel (0) target = $region5
  $region4: #{embedding_layer_forward.5} parent=0 // pred_region
    _
  $region5: #{embedding_layer_forward.5} parent=0 // pred_fallthru
    _
  // Predicated region
  $region6: #{embedding_layer_forward.5} parent=0 // pred_check
    _
  $region7: #{embedding_layer_forward.5} parent=0 // pred_check_branch
    %10 = sbr.rel (0) target = $region9
  $region8: #{embedding_layer_forward.5} parent=0 // pred_region
    _
  $region9: #{embedding_layer_forward.5} parent=0 // pred_fallthru
    _
  %v11 = vld [vmem:[%s0] sm:$0xf]
  %v12 = vld [vmem:[%s0 + $0x4] sm:$0xf]
  %v13 = vld [vmem:[%s1] sm:$0xf]
  %v14 = vld [vmem:[%s1 + $0x4] sm:$0xf]
  %v15 = vld [vmem:[%s1 + $0x8] sm:$0xf]
  %v16 = vld [vmem:[%s1 + $0xc] sm:$0xf]
  %v17 = vld [vmem:[%s1 + $0x10] sm:$0xf]
  %v18 = vld [vmem:[%s1 + $0x14] sm:$0xf]
  %v19 = vld [vmem:[%s1 + $0x18] sm:$0xf]
  %v20 = vld [vmem:[%s1 + $0x1c] sm:$0xf]
  %v21 = vld [vmem:[%s1 + $0x20] sm:$0xf]
  %v22 = vld [vmem:[%s1 + $0x24] sm:$0xf]
  %v23 = vld [vmem:[%s1 + $0x28] sm:$0xf]
  %v24 = vld [vmem:[%s1 + $0x2c] sm:$0xf]
  %v25 = vld [vmem:[%s1 + $0x30] sm:$0xf]
  %v26 = vld [vmem:[%s1 + $0x34] sm:$0xf]
  %v27 = vld [vmem:[%s1 + $0x38] sm:$0xf]
  %v28 = vld [vmem:[%s1 + $0x3c] sm:$0xf]
  %v31 = vunpack.c.l.b16 %v11
  %v32 = vunpack.c.l.b16 %v12
  %v33 = vpack.c.b16 %v32, %v31
  %v51 = vunpack.c.l.b16 %v13
  %v52 = vunpack.c.l.b16 %v14
  %v53 = vunpack.c.l.b16 %v15
  %v54 = vunpack.c.l.b16 %v16
  %v55 = vunpack.c.l.b16 %v17
  %v56 = vunpack.c.l.b16 %v18
  %v57 = vunpack.c.l.b16 %v19
  %v58 = vunpack.c.l.b16 %v20
  %v59 = vunpack.c.l.b16 %v21
  %v60 = vunpack.c.l.b16 %v22
  %v61 = vunpack.c.l.b16 %v23
  %v62 = vunpack.c.l.b16 %v24
  %v63 = vunpack.c.l.b16 %v25
  %v64 = vunpack.c.l.b16 %v26
  %v65 = vunpack.c.l.b16 %v27
  %v66 = vunpack.c.l.b16 %v28
  %v67 = vpack.c.b16 %v52, %v51
  %v68 = vpack.c.b16 %v54, %v53
  %v69 = vpack.c.b16 %v56, %v55
  %v70 = vpack.c.b16 %v58, %v57
  %v71 = vpack.c.b16 %v60, %v59
  %v72 = vpack.c.b16 %v62, %v61
  %v73 = vpack.c.b16 %v64, %v63
  %v74 = vpack.c.b16 %v66, %v65
  %83 = vmatpush.bf16.msra.mxu0 %v74
  %84 = vmatpush.bf16.msra.mxu0 %v73
  %85 = vmatpush.bf16.msra.mxu0 %v72
  %86 = vmatpush.bf16.msra.mxu0 %v71
  %87 = vmatpush.bf16.msra.mxu0 %v70
  %88 = vmatpush.bf16.msra.mxu0 %v69
  %89 = vmatpush.bf16.msra.mxu0 %v68
  %90 = vmatpush.bf16.msra.mxu0 %v67
  %91 = vmatmul.bf16.gmra.mxu0 %v33
  %v92 = vpop.f32.mrf.mxu0
  %v93 = vadd.f32 0.0, %v92
  %v94 = vpop.f32.mrf.mxu0
  %v95 = vadd.f32 0.0, %v94
  %96 = vdwg.mxu0
  %v97 = vpack.c.bf16 %v93, %v93
  %v98 = vpack.c.bf16 %v95, %v95
  %99 = vst [vmem:[%s2] sm:$0xf] %v97
  %100 = vst [vmem:[%s2 + $0x4] sm:$0xf] %v98
  // Predicated region
  $region10: #{embedding_layer_forward.5} parent=0 // pred_check
    _
  $region11: #{embedding_layer_forward.5} parent=0 // pred_check_branch
    %102 = sbr.rel (0) target = $region13
  $region12: #{embedding_layer_forward.5} parent=0 // pred_region
    _
  $region13: #{embedding_layer_forward.5} parent=0 // pred_fallthru
    _
  // Predicated region
  $region14: #{embedding_layer_forward.5} parent=0 // pred_check
    _
  $region15: #{embedding_layer_forward.5} parent=0 // pred_check_branch
    %104 = sbr.rel (0) target = $region17
  $region16: #{embedding_layer_forward.5} parent=0 // pred_region
    _
  $region17: #{embedding_layer_forward.5} parent=0 // pred_fallthru
    _

// kernel: embedding_layer_forward.6
$region0: #{embedding_layer_forward.6}
  #allocation0 [shape = 'u32[]', space=smem, size = 0x4, offset = 0x4, fixed_abs, tag = 'smem constant byte address 0x4 - core index']
  #allocation1 [shape = 'u32[72,128]{1,0:T(1,128)}', space=vmem, size = 0x9000, scoped, tag = 'internal scratch']
  %s0 = inlined_call_operand.vmem [shape: bf16[16,32], index: 0, kind: input, shape index: {}]
  %s1 = inlined_call_operand.vmem [shape: bf16[32,128], index: 1, kind: input, shape index: {}]
  %s2 = inlined_call_operand.vmem [shape: f32[1,128], index: 2, kind: input, shape index: {}]
  %s3 = inlined_call_operand.vmem [shape: bf16[16,128], index: 3, kind: output, shape index: {}]
  %s4 = sld [smem:[#allocation0]]
  $region22: #{embedding_layer_forward.6} parent=0
    _
  %s6 = ssub.s32 1, %s4
  %s7 = scalar_select 0, %s6, %s4
  // Predicated region
  $region2: #{embedding_layer_forward.6} parent=0 // pred_check
    _
  $region3: #{embedding_layer_forward.6} parent=0 // pred_check_branch
    %9 = sbr.rel (0) target = $region5
  $region4: #{embedding_layer_forward.6} parent=0 // pred_region
    _
  $region5: #{embedding_layer_forward.6} parent=0 // pred_fallthru
    _
  // Predicated region
  $region6: #{embedding_layer_forward.6} parent=0 // pred_check
    _
  $region7: #{embedding_layer_forward.6} parent=0 // pred_check_branch
    %11 = sbr.rel (0) target = $region9
  $region8: #{embedding_layer_forward.6} parent=0 // pred_region
    _
  $region9: #{embedding_layer_forward.6} parent=0 // pred_fallthru
    _
  // Predicated region
  $region10: #{embedding_layer_forward.6} parent=0 // pred_check
    _
  $region11: #{embedding_layer_forward.6} parent=0 // pred_check_branch
    %13 = sbr.rel (0) target = $region13
  $region12: #{embedding_layer_forward.6} parent=0 // pred_region
    _
  $region13: #{embedding_layer_forward.6} parent=0 // pred_fallthru
    _
  %v15 = vld [vmem:[%s0] sm:$0xf]
  %v16 = vld [vmem:[%s0 + $0x4] sm:$0xf]
  %v17 = vld [vmem:[%s1] sm:$0xf]
  %v18 = vld [vmem:[%s1 + $0x4] sm:$0xf]
  %v19 = vld [vmem:[%s1 + $0x8] sm:$0xf]
  %v20 = vld [vmem:[%s1 + $0xc] sm:$0xf]
  %v21 = vld [vmem:[%s2] sm:$0x1]
  %v23 = vperm.slane %v21, 0
  %v27 = vunpack.c.l.b16 %v15
  %v28 = vunpack.c.l.b16 %v16
  %v29 = vpack.c.b16 %v28, %v27
  %v34 = vunpack.c.l.b16 %v17
  %v35 = vunpack.c.l.b16 %v18
  %v36 = vunpack.c.l.b16 %v19
  %v37 = vunpack.c.l.b16 %v20
  %v38 = vpack.c.b16 %v35, %v34
  %v39 = vpack.c.b16 %v37, %v36
  %vm42 = vcmask 261120
  %v44 = vsel %vm42, %v29, 0
  %46 = vmatpush.bf16.msra.mxu0 0
  %47 = vmatpush.bf16.msra.mxu0 0
  %48 = vmatpush.bf16.msra.mxu0 0
  %49 = vmatpush.bf16.msra.mxu0 0
  %50 = vmatpush.bf16.msra.mxu0 0
  %51 = vmatpush.bf16.msra.mxu0 0
  %52 = vmatpush.bf16.msra.mxu0 %v39
  %53 = vmatpush.bf16.msra.mxu0 %v38
  %54 = vmatmul.bf16.gmra.mxu0 %v44
  %v55 = vpop.f32.mrf.mxu0
  %v56 = vadd.f32 %v23, %v55
  %v57 = vpop.f32.mrf.mxu0
  %v58 = vadd.f32 %v23, %v57
  %59 = vdwg.mxu0
  %v60 = vmax.f32 %v56, 0.0
  %v61 = vmax.f32 %v58, 0.0
  %v62 = vpack.c.bf16 %v60, %v60
  %v63 = vpack.c.bf16 %v61, %v61
  %64 = vst [vmem:[%s3] sm:$0xf] %v62
  %65 = vst [vmem:[%s3 + $0x4] sm:$0xf] %v63
  // Predicated region
  $region14: #{embedding_layer_forward.6} parent=0 // pred_check
    _
  $region15: #{embedding_layer_forward.6} parent=0 // pred_check_branch
    %67 = sbr.rel (0) target = $region17
  $region16: #{embedding_layer_forward.6} parent=0 // pred_region
    _
  $region17: #{embedding_layer_forward.6} parent=0 // pred_fallthru
    _
  // Predicated region
  $region18: #{embedding_layer_forward.6} parent=0 // pred_check
    _
  $region19: #{embedding_layer_forward.6} parent=0 // pred_check_branch
    %69 = sbr.rel (0) target = $region21
  $region20: #{embedding_layer_forward.6} parent=0 // pred_region
    _
  $region21: #{embedding_layer_forward.6} parent=0 // pred_fallthru
    _

// kernel: embedding_layer_forward.4
$region0: #{embedding_layer_forward.4}
  #allocation0 [shape = 'u32[]', space=smem, size = 0x4, offset = 0x4, fixed_abs, tag = 'smem constant byte address 0x4 - core index']
  #allocation1 [shape = 'u32[72,128]{1,0:T(1,128)}', space=vmem, size = 0x9000, scoped, tag = 'internal scratch']
  %s0 = inlined_call_operand.vmem [shape: bf16[32,128], index: 0, kind: input, shape index: {}]
  %s1 = inlined_call_operand.vmem [shape: bf16[128,128], index: 1, kind: input, shape index: {}]
  %s2 = inlined_call_operand.vmem [shape: bf16[32,128], index: 2, kind: output, shape index: {}]
  %s3 = sld [smem:[#allocation0]]
  $region41: #{embedding_layer_forward.4} parent=0
    _
  %s5 = ssub.s32 1, %s3
  %s6 = scalar_select 0, %s5, %s3
  loop: start=0, step=1, limit=4
  $region2: #{embedding_layer_forward.4} parent=0 // loop_pre_header
    _
  $region3: #{embedding_layer_forward.4} parent=0 // loop_header
    %s8 = sphi 0, %s12
    %p9 = scmp.ge.s32.totalorder %s8, 4
    %s18 = sphi 0, %s20
    %s21 = sphi 0, %s18
    %s22 = sphi 0, %s21
    %s38 = sphi 0, %s22
    %s42 = sphi 0, %s42
    %s44 = sphi 0, %s42
    %s45 = sphi 0, %s44
    %s59 = sphi 0, %s45
    %s65 = sphi 0, %s67
    %s68 = sphi 0, %s65
    %s69 = sphi 0, %s68
    %s85 = sphi 0, %s69
  $region4: #{embedding_layer_forward.4} parent=0 // loop_header_branch
    %11 = sbr.rel (%p9) target = $region8
  $region5: #{embedding_layer_forward.4} parent=0 // loop_body
    %s13 = ssub.s32 %s8, 1
    %s14 = ssub.s32 %s8, 2
    %s15 = sadd.s32 %s8, 1
    %s16 = ssub.s32 %s8, %s15
    %p17 = scmp.eq.s32.totalorder %s16, 0
    %s19 = sadd.s32 %s18, 1
    %s20 = scalar_select %p17, %s18, %s19
    %p23 = pneg %p17
    %p24 = scmp.eq.s32.totalorder %s8, 1
    %p25 = por %p23, %p24
    %p26 = scmp.ne.s32.totalorder %s18, %s21
    %p27 = scmp.eq.s32.totalorder %s8, 0
    %p28 = por %p26, %p27
    %p29 = scmp.ne.s32.totalorder %s18, %s21
    %p30 = scmp.eq.s32.totalorder %s13, 1
    %p31 = por %p29, %p30
    %p32 = scmp.ne.s32.totalorder %s21, %s22
    %p33 = scmp.eq.s32.totalorder %s13, 0
    %p34 = por %p32, %p33
    %p35 = scmp.ne.s32.totalorder %s21, %s22
    %p36 = scmp.eq.s32.totalorder %s14, 1
    %p37 = por %p35, %p36
    %p39 = scmp.ne.s32.totalorder %s22, %s38
    %p40 = scmp.eq.s32.totalorder %s14, 0
    %p41 = por %p39, %p40
    %s43 = sadd.s32 %s42, 1
    %p46 = scmp.eq.s32.totalorder %s8, 1
    %p47 = scmp.ne.s32.totalorder %s42, %s44
    %p48 = scmp.eq.s32.totalorder %s8, 0
    %p49 = por %p47, %p48
    %p50 = scmp.ne.s32.totalorder %s42, %s44
    %p51 = scmp.eq.s32.totalorder %s13, 1
    %p52 = por %p50, %p51
    %p53 = scmp.ne.s32.totalorder %s44, %s45
    %p54 = scmp.eq.s32.totalorder %s13, 0
    %p55 = por %p53, %p54
    %p56 = scmp.ne.s32.totalorder %s44, %s45
    %p57 = scmp.eq.s32.totalorder %s14, 1
    %p58 = por %p56, %p57
    %p60 = scmp.ne.s32.totalorder %s45, %s59
    %p61 = scmp.eq.s32.totalorder %s14, 0
    %p62 = por %p60, %p61
    %s63 = ssub.s32 %s8, %s15
    %p64 = scmp.eq.s32.totalorder %s63, 0
    %s66 = sadd.s32 %s65, 1
    %s67 = scalar_select %p64, %s65, %s66
    %p70 = pneg %p64
    %p71 = scmp.eq.s32.totalorder %s8, 1
    %p72 = por %p70, %p71
    %p73 = scmp.ne.s32.totalorder %s65, %s68
    %p74 = scmp.eq.s32.totalorder %s8, 0
    %p75 = por %p73, %p74
    %p76 = scmp.ne.s32.totalorder %s65, %s68
    %p77 = scmp.eq.s32.totalorder %s13, 1
    %p78 = por %p76, %p77
    %p79 = scmp.ne.s32.totalorder %s68, %s69
    %p80 = scmp.eq.s32.totalorder %s13, 0
    %p81 = por %p79, %p80
    %p82 = scmp.ne.s32.totalorder %s68, %s69
    %p83 = scmp.eq.s32.totalorder %s14, 1
    %p84 = por %p82, %p83
    %p86 = scmp.ne.s32.totalorder %s69, %s85
    %p87 = scmp.eq.s32.totalorder %s14, 0
    %p88 = por %p86, %p87
    %p89 = scmp.le.s32.totalorder 1, %s8
    %p90 = scmp.lt.s32.totalorder %s8, 3
    %p91 = pnand %p89, %p90
    %p92 = pneg %p91
    // Predicated region
    $region9: #{embedding_layer_forward.4} parent=5 // pred_check
      _
    $region10: #{embedding_layer_forward.4} parent=5 // pred_check_branch
      %94 = sbr.rel (%p91) target = $region12
    $region11: #{embedding_layer_forward.4} parent=5 // pred_region
      %s95 = ssub.s32 %s8, 1
      // Predicated region
      $region13: #{embedding_layer_forward.4} parent=11 // pred_check
        %p96 = pneg %p55
      $region14: #{embedding_layer_forward.4} parent=11 // pred_check_branch
        %98 = sbr.rel (%p96) target = $region16
      $region15: #{embedding_layer_forward.4} parent=11 // pred_region
        _
      $region16: #{embedding_layer_forward.4} parent=11 // pred_fallthru
        _
    $region12: #{embedding_layer_forward.4} parent=5 // pred_fallthru
      _
    %p99 = scmp.lt.s32.totalorder %s8, 2
    // Predicated region
    $region17: #{embedding_layer_forward.4} parent=5 // pred_check
      %p100 = pneg %p99
    $region18: #{embedding_layer_forward.4} parent=5 // pred_check_branch
      %102 = sbr.rel (%p100) target = $region20
    $region19: #{embedding_layer_forward.4} parent=5 // pred_region
      // Predicated region
      $region21: #{embedding_layer_forward.4} parent=19 // pred_check
        %p103 = pneg %p28
      $region22: #{embedding_layer_forward.4} parent=19 // pred_check_branch
        %105 = sbr.rel (%p103) target = $region24
      $region23: #{embedding_layer_forward.4} parent=19 // pred_region
        %s106 = smul.u32 2, %s8
        %p107 = scmp.lt.s32.totalorder %s106, 3
        %s108 = scalar_select %p107, %s106, 3
        %s109 = smul.addr %s108, 4
        %s110 = scalar_lea.vmem %s0, %s109
        %s111 = smul.u32 2, %s8
      $region24: #{embedding_layer_forward.4} parent=19 // pred_fallthru
        _
    $region20: #{embedding_layer_forward.4} parent=5 // pred_fallthru
      _
    %p112 = scmp.le.s32.totalorder 1, %s8
    %p113 = scmp.lt.s32.totalorder %s8, 3
    %p114 = pnand %p112, %p113
    %p115 = pneg %p114
    // Predicated region
    $region25: #{embedding_layer_forward.4} parent=5 // pred_check
      _
    $region26: #{embedding_layer_forward.4} parent=5 // pred_check_branch
      %117 = sbr.rel (%p114) target = $region28
    $region27: #{embedding_layer_forward.4} parent=5 // pred_region
      %s118 = ssub.s32 %s8, 1
      %s119 = smul.u32 2, %s13
      %p120 = scmp.lt.s32.totalorder %s119, 3
      %s121 = scalar_select %p120, %s119, 3
      %s122 = smul.addr %s121, 4
      %s123 = scalar_lea.vmem %s0, %s122
      %p124 = pneg %p34
      %p125 = pneg %p31
      %p126 = pneg %p55
      %p127 = pneg %p52
      %p128 = pneg %p81
      %p129 = pneg %p78
      %s130 = smul.u32 2, %s13
      %p131 = scmp.lt.s32.totalorder %s130, 3
      %s132 = scalar_select %p131, %s130, 3
      %s133 = smul.addr %s132, 4
      %s134 = scalar_lea.vmem %s2, %s133
      %s135 = smul.u32 2, %s13
      %p136 = scmp.lt.s32.totalorder %s135, 3
      %s137 = scalar_select %p136, %s135, 3
      %s138 = smul.addr %s137, 4
      %s139 = scalar_lea.vmem %s0, %s138
      %s140 = smul.u32 2, %s13
      %s141 = smul.u32 2, %s13
      %p142 = scmp.lt.s32.totalorder %s141, 3
      %s143 = scalar_select %p142, %s141, 3
      %s144 = smul.addr %s143, 4
      %s145 = scalar_lea.vmem %s2, %s144
      %s146 = smul.u32 2, %s13
      %v147 = vld [vmem:[%s139] sm:$0xf]
      %v148 = vld [vmem:[%s139 + $0x4] sm:$0xf]
      %v149 = vld [vmem:[%s1] sm:$0xf]
      %v150 = vld [vmem:[%s1 + $0x4] sm:$0xf]
      %v151 = vld [vmem:[%s1 + $0x8] sm:$0xf]
      %v152 = vld [vmem:[%s1 + $0xc] sm:$0xf]
      %v153 = vld [vmem:[%s1 + $0x10] sm:$0xf]
      %v154 = vld [vmem:[%s1 + $0x14] sm:$0xf]
      %v155 = vld [vmem:[%s1 + $0x18] sm:$0xf]
      %v156 = vld [vmem:[%s1 + $0x1c] sm:$0xf]
      %v157 = vld [vmem:[%s1 + $0x20] sm:$0xf]
      %v158 = vld [vmem:[%s1 + $0x24] sm:$0xf]
      %v159 = vld [vmem:[%s1 + $0x28] sm:$0xf]
      %v160 = vld [vmem:[%s1 + $0x2c] sm:$0xf]
      %v161 = vld [vmem:[%s1 + $0x30] sm:$0xf]
      %v162 = vld [vmem:[%s1 + $0x34] sm:$0xf]
      %v163 = vld [vmem:[%s1 + $0x38] sm:$0xf]
      %v164 = vld [vmem:[%s1 + $0x3c] sm:$0xf]
      %v167 = vunpack.c.l.b16 %v147
      %v168 = vunpack.c.l.b16 %v148
      %v169 = vpack.c.b16 %v168, %v167
      %v187 = vunpack.c.l.b16 %v149
      %v188 = vunpack.c.l.b16 %v150
      %v189 = vunpack.c.l.b16 %v151
      %v190 = vunpack.c.l.b16 %v152
      %v191 = vunpack.c.l.b16 %v153
      %v192 = vunpack.c.l.b16 %v154
      %v193 = vunpack.c.l.b16 %v155
      %v194 = vunpack.c.l.b16 %v156
      %v195 = vunpack.c.l.b16 %v157
      %v196 = vunpack.c.l.b16 %v158
      %v197 = vunpack.c.l.b16 %v159
      %v198 = vunpack.c.l.b16 %v160
      %v199 = vunpack.c.l.b16 %v161
      %v200 = vunpack.c.l.b16 %v162
      %v201 = vunpack.c.l.b16 %v163
      %v202 = vunpack.c.l.b16 %v164
      %v203 = vpack.c.b16 %v188, %v187
      %v204 = vpack.c.b16 %v190, %v189
      %v205 = vpack.c.b16 %v192, %v191
      %v206 = vpack.c.b16 %v194, %v193
      %v207 = vpack.c.b16 %v196, %v195
      %v208 = vpack.c.b16 %v198, %v197
      %v209 = vpack.c.b16 %v200, %v199
      %v210 = vpack.c.b16 %v202, %v201
      %219 = vmatpush.bf16.msra.mxu0 %v210
      %220 = vmatpush.bf16.msra.mxu0 %v209
      %221 = vmatpush.bf16.msra.mxu0 %v208
      %222 = vmatpush.bf16.msra.mxu0 %v207
      %223 = vmatpush.bf16.msra.mxu0 %v206
      %224 = vmatpush.bf16.msra.mxu0 %v205
      %225 = vmatpush.bf16.msra.mxu0 %v204
      %226 = vmatpush.bf16.msra.mxu0 %v203
      %227 = vmatmul.bf16.gmra.mxu0 %v169
      %v228 = vpop.f32.mrf.mxu0
      %v229 = vadd.f32 0.0, %v228
      %v230 = vpop.f32.mrf.mxu0
      %v231 = vadd.f32 0.0, %v230
      %232 = vdwg.mxu0
      %v233 = vpack.c.bf16 %v229, %v229
      %v234 = vpack.c.bf16 %v231, %v231
      %235 = vst [vmem:[%s145] sm:$0xf] %v233
      %236 = vst [vmem:[%s145 + $0x4] sm:$0xf] %v234
      %s237 = smul.u32 2, %s13
      %p238 = scmp.lt.s32.totalorder %s237, 3
      %s239 = scalar_select %p238, %s237, 3
      %s240 = smul.addr %s239, 4
      %s241 = scalar_lea.vmem %s2, %s240
      // Predicated region
      $region29: #{embedding_layer_forward.4} parent=27 // pred_check
        %p242 = pneg %p78
      $region30: #{embedding_layer_forward.4} parent=27 // pred_check_branch
        %244 = sbr.rel (%p242) target = $region32
      $region31: #{embedding_layer_forward.4} parent=27 // pred_region
        %s245 = smul.u32 2, %s13
      $region32: #{embedding_layer_forward.4} parent=27 // pred_fallthru
        _
    $region28: #{embedding_layer_forward.4} parent=5 // pred_fallthru
      _
    %p246 = scmp.le.s32.totalorder 2, %s8
    // Predicated region
    $region33: #{embedding_layer_forward.4} parent=5 // pred_check
      %p247 = pneg %p246
    $region34: #{embedding_layer_forward.4} parent=5 // pred_check_branch
      %249 = sbr.rel (%p247) target = $region36
    $region35: #{embedding_layer_forward.4} parent=5 // pred_region
      %s250 = ssub.s32 %s8, 2
      // Predicated region
      $region37: #{embedding_layer_forward.4} parent=35 // pred_check
        %p251 = pneg %p84
      $region38: #{embedding_layer_forward.4} parent=35 // pred_check_branch
        %253 = sbr.rel (%p251) target = $region40
      $region39: #{embedding_layer_forward.4} parent=35 // pred_region
        %s254 = smul.u32 2, %s14
        %p255 = scmp.lt.s32.totalorder %s254, 3
        %s256 = scalar_select %p255, %s254, 3
        %s257 = smul.addr %s256, 4
        %s258 = scalar_lea.vmem %s2, %s257
      $region40: #{embedding_layer_forward.4} parent=35 // pred_fallthru
        _
    $region36: #{embedding_layer_forward.4} parent=5 // pred_fallthru
      _
  $region6: #{embedding_layer_forward.4} parent=0 // loop_footer
    %s12 = sadd.s32 1, %s8
  $region7: #{embedding_layer_forward.4} parent=0 // loop_footer_branch
    %7 = sbr.rel target = $region3
  $region8: #{embedding_layer_forward.4} parent=0 // loop_exit
    _

// kernel: embedding_layer_forward.7
$region0: #{embedding_layer_forward.7}
  #allocation0 [shape = 'u32[]', space=smem, size = 0x4, offset = 0x4, fixed_abs, tag = 'smem constant byte address 0x4 - core index']
  #allocation1 [shape = 'u32[72,128]{1,0:T(1,128)}', space=vmem, size = 0x9000, scoped, tag = 'internal scratch']
  %s0 = inlined_call_operand.vmem [shape: bf16[32,16], index: 0, kind: input, shape index: {}]
  %s1 = inlined_call_operand.vmem [shape: bf16[16,128], index: 1, kind: input, shape index: {}]
  %s2 = inlined_call_operand.vmem [shape: f32[1,128], index: 2, kind: input, shape index: {}]
  %s3 = inlined_call_operand.vmem [shape: bf16[32,128], index: 3, kind: output, shape index: {}]
  %s4 = sld [smem:[#allocation0]]
  $region45: #{embedding_layer_forward.7} parent=0
    _
  %s6 = ssub.s32 1, %s4
  %s7 = scalar_select 0, %s6, %s4
  loop: start=0, step=1, limit=4
  $region2: #{embedding_layer_forward.7} parent=0 // loop_pre_header
    _
  $region3: #{embedding_layer_forward.7} parent=0 // loop_header
    %s9 = sphi 0, %s13
    %p10 = scmp.ge.s32.totalorder %s9, 4
    %s19 = sphi 0, %s21
    %s22 = sphi 0, %s19
    %s23 = sphi 0, %s22
    %s39 = sphi 0, %s23
    %s43 = sphi 0, %s43
    %s45 = sphi 0, %s43
    %s46 = sphi 0, %s45
    %s60 = sphi 0, %s46
    %s64 = sphi 0, %s64
    %s66 = sphi 0, %s64
    %s67 = sphi 0, %s66
    %s81 = sphi 0, %s67
    %s87 = sphi 0, %s89
    %s90 = sphi 0, %s87
    %s91 = sphi 0, %s90
    %s107 = sphi 0, %s91
  $region4: #{embedding_layer_forward.7} parent=0 // loop_header_branch
    %12 = sbr.rel (%p10) target = $region8
  $region5: #{embedding_layer_forward.7} parent=0 // loop_body
    %s14 = ssub.s32 %s9, 1
    %s15 = ssub.s32 %s9, 2
    %s16 = sadd.s32 %s9, 1
    %s17 = ssub.s32 %s9, %s16
    %p18 = scmp.eq.s32.totalorder %s17, 0
    %s20 = sadd.s32 %s19, 1
    %s21 = scalar_select %p18, %s19, %s20
    %p24 = pneg %p18
    %p25 = scmp.eq.s32.totalorder %s9, 1
    %p26 = por %p24, %p25
    %p27 = scmp.ne.s32.totalorder %s19, %s22
    %p28 = scmp.eq.s32.totalorder %s9, 0
    %p29 = por %p27, %p28
    %p30 = scmp.ne.s32.totalorder %s19, %s22
    %p31 = scmp.eq.s32.totalorder %s14, 1
    %p32 = por %p30, %p31
    %p33 = scmp.ne.s32.totalorder %s22, %s23
    %p34 = scmp.eq.s32.totalorder %s14, 0
    %p35 = por %p33, %p34
    %p36 = scmp.ne.s32.totalorder %s22, %s23
    %p37 = scmp.eq.s32.totalorder %s15, 1
    %p38 = por %p36, %p37
    %p40 = scmp.ne.s32.totalorder %s23, %s39
    %p41 = scmp.eq.s32.totalorder %s15, 0
    %p42 = por %p40, %p41
    %s44 = sadd.s32 %s43, 1
    %p47 = scmp.eq.s32.totalorder %s9, 1
    %p48 = scmp.ne.s32.totalorder %s43, %s45
    %p49 = scmp.eq.s32.totalorder %s9, 0
    %p50 = por %p48, %p49
    %p51 = scmp.ne.s32.totalorder %s43, %s45
    %p52 = scmp.eq.s32.totalorder %s14, 1
    %p53 = por %p51, %p52
    %p54 = scmp.ne.s32.totalorder %s45, %s46
    %p55 = scmp.eq.s32.totalorder %s14, 0
    %p56 = por %p54, %p55
    %p57 = scmp.ne.s32.totalorder %s45, %s46
    %p58 = scmp.eq.s32.totalorder %s15, 1
    %p59 = por %p57, %p58
    %p61 = scmp.ne.s32.totalorder %s46, %s60
    %p62 = scmp.eq.s32.totalorder %s15, 0
    %p63 = por %p61, %p62
    %s65 = sadd.s32 %s64, 1
    %p68 = scmp.eq.s32.totalorder %s9, 1
    %p69 = scmp.ne.s32.totalorder %s64, %s66
    %p70 = scmp.eq.s32.totalorder %s9, 0
    %p71 = por %p69, %p70
    %p72 = scmp.ne.s32.totalorder %s64, %s66
    %p73 = scmp.eq.s32.totalorder %s14, 1
    %p74 = por %p72, %p73
    %p75 = scmp.ne.s32.totalorder %s66, %s67
    %p76 = scmp.eq.s32.totalorder %s14, 0
    %p77 = por %p75, %p76
    %p78 = scmp.ne.s32.totalorder %s66, %s67
    %p79 = scmp.eq.s32.totalorder %s15, 1
    %p80 = por %p78, %p79
    %p82 = scmp.ne.s32.totalorder %s67, %s81
    %p83 = scmp.eq.s32.totalorder %s15, 0
    %p84 = por %p82, %p83
    %s85 = ssub.s32 %s9, %s16
    %p86 = scmp.eq.s32.totalorder %s85, 0
    %s88 = sadd.s32 %s87, 1
    %s89 = scalar_select %p86, %s87, %s88
    %p92 = pneg %p86
    %p93 = scmp.eq.s32.totalorder %s9, 1
    %p94 = por %p92, %p93
    %p95 = scmp.ne.s32.totalorder %s87, %s90
    %p96 = scmp.eq.s32.totalorder %s9, 0
    %p97 = por %p95, %p96
    %p98 = scmp.ne.s32.totalorder %s87, %s90
    %p99 = scmp.eq.s32.totalorder %s14, 1
    %p100 = por %p98, %p99
    %p101 = scmp.ne.s32.totalorder %s90, %s91
    %p102 = scmp.eq.s32.totalorder %s14, 0
    %p103 = por %p101, %p102
    %p104 = scmp.ne.s32.totalorder %s90, %s91
    %p105 = scmp.eq.s32.totalorder %s15, 1
    %p106 = por %p104, %p105
    %p108 = scmp.ne.s32.totalorder %s91, %s107
    %p109 = scmp.eq.s32.totalorder %s15, 0
    %p110 = por %p108, %p109
    %p111 = scmp.le.s32.totalorder 1, %s9
    %p112 = scmp.lt.s32.totalorder %s9, 3
    %p113 = pnand %p111, %p112
    %p114 = pneg %p113
    // Predicated region
    $region9: #{embedding_layer_forward.7} parent=5 // pred_check
      _
    $region10: #{embedding_layer_forward.7} parent=5 // pred_check_branch
      %116 = sbr.rel (%p113) target = $region12
    $region11: #{embedding_layer_forward.7} parent=5 // pred_region
      %s117 = ssub.s32 %s9, 1
      // Predicated region
      $region13: #{embedding_layer_forward.7} parent=11 // pred_check
        %p118 = pneg %p56
      $region14: #{embedding_layer_forward.7} parent=11 // pred_check_branch
        %120 = sbr.rel (%p118) target = $region16
      $region15: #{embedding_layer_forward.7} parent=11 // pred_region
        _
      $region16: #{embedding_layer_forward.7} parent=11 // pred_fallthru
        _
      // Predicated region
      $region17: #{embedding_layer_forward.7} parent=11 // pred_check
        %p121 = pneg %p77
      $region18: #{embedding_layer_forward.7} parent=11 // pred_check_branch
        %123 = sbr.rel (%p121) target = $region20
      $region19: #{embedding_layer_forward.7} parent=11 // pred_region
        _
      $region20: #{embedding_layer_forward.7} parent=11 // pred_fallthru
        _
    $region12: #{embedding_layer_forward.7} parent=5 // pred_fallthru
      _
    %p124 = scmp.lt.s32.totalorder %s9, 2
    // Predicated region
    $region21: #{embedding_layer_forward.7} parent=5 // pred_check
      %p125 = pneg %p124
    $region22: #{embedding_layer_forward.7} parent=5 // pred_check_branch
      %127 = sbr.rel (%p125) target = $region24
    $region23: #{embedding_layer_forward.7} parent=5 // pred_region
      // Predicated region
      $region25: #{embedding_layer_forward.7} parent=23 // pred_check
        %p128 = pneg %p29
      $region26: #{embedding_layer_forward.7} parent=23 // pred_check_branch
        %130 = sbr.rel (%p128) target = $region28
      $region27: #{embedding_layer_forward.7} parent=23 // pred_region
        %s131 = smul.u32 2, %s9
        %p132 = scmp.lt.s32.totalorder %s131, 3
        %s133 = scalar_select %p132, %s131, 3
        %s134 = smul.addr %s133, 4
        %s135 = scalar_lea.vmem %s0, %s134
        %s136 = smul.u32 2, %s9
      $region28: #{embedding_layer_forward.7} parent=23 // pred_fallthru
        _
    $region24: #{embedding_layer_forward.7} parent=5 // pred_fallthru
      _
    %p137 = scmp.le.s32.totalorder 1, %s9
    %p138 = scmp.lt.s32.totalorder %s9, 3
    %p139 = pnand %p137, %p138
    %p140 = pneg %p139
    // Predicated region
    $region29: #{embedding_layer_forward.7} parent=5 // pred_check
      _
    $region30: #{embedding_layer_forward.7} parent=5 // pred_check_branch
      %142 = sbr.rel (%p139) target = $region32
    $region31: #{embedding_layer_forward.7} parent=5 // pred_region
      %s143 = ssub.s32 %s9, 1
      %s144 = smul.u32 2, %s14
      %p145 = scmp.lt.s32.totalorder %s144, 3
      %s146 = scalar_select %p145, %s144, 3
      %s147 = smul.addr %s146, 4
      %s148 = scalar_lea.vmem %s0, %s147
      %p149 = pneg %p35
      %p150 = pneg %p32
      %p151 = pneg %p56
      %p152 = pneg %p53
      %p153 = pneg %p77
      %p154 = pneg %p74
      %p155 = pneg %p103
      %p156 = pneg %p100
      %s157 = smul.u32 2, %s14
      %p158 = scmp.lt.s32.totalorder %s157, 3
      %s159 = scalar_select %p158, %s157, 3
      %s160 = smul.addr %s159, 4
      %s161 = scalar_lea.vmem %s3, %s160
      %s162 = smul.u32 2, %s14
      %p163 = scmp.lt.s32.totalorder %s162, 3
      %s164 = scalar_select %p163, %s162, 3
      %s165 = smul.addr %s164, 4
      %s166 = scalar_lea.vmem %s0, %s165
      %s167 = smul.u32 2, %s14
      %s168 = smul.u32 2, %s14
      %p169 = scmp.lt.s32.totalorder %s168, 3
      %s170 = scalar_select %p169, %s168, 3
      %s171 = smul.addr %s170, 4
      %s172 = scalar_lea.vmem %s3, %s171
      %s173 = smul.u32 2, %s14
      %v175 = vld [vmem:[%s166] sm:$0xf]
      %v176 = vld [vmem:[%s166 + $0x4] sm:$0xf]
      %v177 = vld [vmem:[%s1] sm:$0xf]
      %v178 = vld [vmem:[%s1 + $0x4] sm:$0xf]
      %v179 = vld [vmem:[%s2] sm:$0x1]
      %v181 = vperm.slane %v179, 0
      %v185 = vunpack.c.l.b16 %v175
      %v186 = vunpack.c.l.b16 %v176
      %v187 = vpack.c.b16 %v186, %v185
      %v190 = vunpack.c.l.b16 %v177
      %v191 = vunpack.c.l.b16 %v178
      %v192 = vpack.c.b16 %v191, %v190
      %vm194 = vcmask 130048
      %v196 = vsel %vm194, %v187, 0
      %198 = vmatpush.bf16.msra.mxu0 0
      %199 = vmatpush.bf16.msra.mxu0 0
      %200 = vmatpush.bf16.msra.mxu0 0
      %201 = vmatpush.bf16.msra.mxu0 0
      %202 = vmatpush.bf16.msra.mxu0 0
      %203 = vmatpush.bf16.msra.mxu0 0
      %204 = vmatpush.bf16.msra.mxu0 0
      %205 = vmatpush.bf16.msra.mxu0 %v192
      %206 = vmatmul.bf16.gmra.mxu0 %v196
      %v207 = vpop.f32.mrf.mxu0
      %v208 = vadd.f32 %v181, %v207
      %v209 = vpop.f32.mrf.mxu0
      %v210 = vadd.f32 %v181, %v209
      %211 = vdwg.mxu0
      %v212 = vmax.f32 %v208, 0.0
      %v213 = vmax.f32 %v210, 0.0
      %v214 = vpack.c.bf16 %v212, %v212
      %v215 = vpack.c.bf16 %v213, %v213
      %216 = vst [vmem:[%s172] sm:$0xf] %v214
      %217 = vst [vmem:[%s172 + $0x4] sm:$0xf] %v215
      %s218 = smul.u32 2, %s14
      %p219 = scmp.lt.s32.totalorder %s218, 3
      %s220 = scalar_select %p219, %s218, 3
      %s221 = smul.addr %s220, 4
      %s222 = scalar_lea.vmem %s3, %s221
      // Predicated region
      $region33: #{embedding_layer_forward.7} parent=31 // pred_check
        %p223 = pneg %p100
      $region34: #{embedding_layer_forward.7} parent=31 // pred_check_branch
        %225 = sbr.rel (%p223) target = $region36
      $region35: #{embedding_layer_forward.7} parent=31 // pred_region
        %s226 = smul.u32 2, %s14
      $region36: #{embedding_layer_forward.7} parent=31 // pred_fallthru
        _
    $region32: #{embedding_layer_forward.7} parent=5 // pred_fallthru
      _
    %p227 = scmp.le.s32.totalorder 2, %s9
    // Predicated region
    $region37: #{embedding_layer_forward.7} parent=5 // pred_check
      %p228 = pneg %p227
    $region38: #{embedding_layer_forward.7} parent=5 // pred_check_branch
      %230 = sbr.rel (%p228) target = $region40
    $region39: #{embedding_layer_forward.7} parent=5 // pred_region
      %s231 = ssub.s32 %s9, 2
      // Predicated region
      $region41: #{embedding_layer_forward.7} parent=39 // pred_check
        %p232 = pneg %p106
      $region42: #{embedding_layer_forward.7} parent=39 // pred_check_branch
        %234 = sbr.rel (%p232) target = $region44
      $region43: #{embedding_layer_forward.7} parent=39 // pred_region
        %s235 = smul.u32 2, %s15
        %p236 = scmp.lt.s32.totalorder %s235, 3
        %s237 = scalar_select %p236, %s235, 3
        %s238 = smul.addr %s237, 4
        %s239 = scalar_lea.vmem %s3, %s238
      $region44: #{embedding_layer_forward.7} parent=39 // pred_fallthru
        _
    $region40: #{embedding_layer_forward.7} parent=5 // pred_fallthru
      _
  $region6: #{embedding_layer_forward.7} parent=0 // loop_footer
    %s13 = sadd.s32 1, %s9
  $region7: #{embedding_layer_forward.7} parent=0 // loop_footer_branch
    %8 = sbr.rel target = $region3
  $region8: #{embedding_layer_forward.7} parent=0 // loop_exit
    _

</llo_original>
